<compile_context>
chip_gen: v5e
topology: v5e:2x2
jax: 0.10.0
libtpu: 0.0.40
codegen_flags: <defaults>
</compile_context>

<pallas_src>
import jax
import jax.numpy as jnp
from jax import lax
from jax.experimental import pallas as pl
from jax.experimental.pallas import tpu as pltpu


def _round_up(x, m):
    return ((x + m - 1) // m) * m


def _agent_decoder_kernel(x_ref, w1_ref, b1_ref, w2_ref, b2_ref, cs_ref, o_ref):
    # x_ref:  (TILE_ROWS, dim)  f32  (batch dim squeezed)
    # w1_ref: (dim, 128)        bf16
    # b1_ref: (1, 128)          f32
    # w2_ref: (128, 30)         f32
    # b2_ref: (1, 30)           f32
    # cs_ref: (1, 30)           f32  per-batch current_state[:, :3] tiled x10
    # o_ref:  (TILE_ROWS, 30)   f32
    x = x_ref[...].astype(jnp.bfloat16)  # in-kernel cast: free VPU work under DMA slack
    h = jnp.dot(x, w1_ref[...], preferred_element_type=jnp.float32) + b1_ref[...]
    # ELU (alpha = 1.0).  exp lands on the EUP slot (free in this mem-bound kernel).
    h = jnp.where(h > 0, h, jnp.exp(h) - 1.0)
    y = jnp.dot(h, w2_ref[...], preferred_element_type=jnp.float32)
    # Fused bias + per-batch current_state offset -> single lane-exact store.
    o_ref[...] = y + b2_ref[...] + cs_ref[...]


def agent_decoder_forward(encoding, current_state, params, *, max_time, max_branch,
                          max_tile_rows=2048):
    """Pallas implementation of AgentDecoder.forward.

    encoding:      (B, max_branch * max_time, dim) float32 (any layout reshapable to it)
    current_state: (B, S) float32, S >= 3
    returns:       (B, max_branch, max_time * 10, 3) float32
    """
    w1, b1, w2, b2 = params
    dim = w1.shape[0]
    # Shape asserts so a different hidden size fails loudly (review concern).
    assert w1.shape == (dim, 128), w1.shape
    assert b1.shape == (128,), b1.shape
    assert w2.shape == (128, 30), w2.shape
    assert b2.shape == (30,), b2.shape
    assert current_state.shape[-1] >= 3, current_state.shape

    B = encoding.shape[0]
    rows_per_batch = max_branch * max_time
    # Metadata-only reshape (no copy) when encoding is already contiguous.
    x = jnp.reshape(encoding, (B, rows_per_batch, dim)).astype(jnp.float32)

    # Row tile per batch: equal to the full per-batch row count when small
    # (block == full dim is always legal), else balanced tiles <= max_tile_rows.
    if rows_per_batch <= max_tile_rows:
        tile_rows = rows_per_batch
    else:
        n_tiles = pl.cdiv(rows_per_batch, max_tile_rows)
        tile_rows = _round_up(pl.cdiv(rows_per_batch, n_tiles), 8)
    tiles_per_batch = pl.cdiv(rows_per_batch, tile_rows)

    w1_bf16 = w1.astype(jnp.bfloat16)                       # tiny one-off cast
    b1_2d = jnp.reshape(b1, (1, 128)).astype(jnp.float32)
    w2_f32 = w2.astype(jnp.float32)
    b2_2d = jnp.reshape(b2, (1, 30)).astype(jnp.float32)
    # Per-batch offset table: output lane l receives current_state[b, l % 3].
    cs_table = jnp.tile(current_state[:, :3].astype(jnp.float32), (1, 10))
    cs_table = jnp.reshape(cs_table, (B, 1, 30))

    cost = pl.CostEstimate(
        flops=2 * B * rows_per_batch * (dim * 128 + 128 * 30),
        transcendentals=B * rows_per_batch * 128,
        bytes_accessed=(
            B * rows_per_batch * dim * 4      # f32 activations in
            + B * rows_per_batch * 30 * 4     # 30-lane f32 output
            + dim * 128 * 2                   # bf16 w1
            + 128 * 30 * 4 + 128 * 4 + 30 * 4 # w2 / biases
            + B * 30 * 4                      # current_state table
        ),
    )

    out = pl.pallas_call(
        _agent_decoder_kernel,
        out_shape=jax.ShapeDtypeStruct((B, rows_per_batch, 30), jnp.float32),
        grid_spec=pltpu.PrefetchScalarGridSpec(
            num_scalar_prefetch=0,
            grid=(B, tiles_per_batch),
            in_specs=[
                pl.BlockSpec((None, tile_rows, dim), lambda b, t: (b, t, 0)),
                pl.BlockSpec((dim, 128), lambda b, t: (0, 0)),
                pl.BlockSpec((1, 128), lambda b, t: (0, 0)),
                pl.BlockSpec((128, 30), lambda b, t: (0, 0)),
                pl.BlockSpec((1, 30), lambda b, t: (0, 0)),
                pl.BlockSpec((None, 1, 30), lambda b, t: (b, 0, 0)),
            ],
            out_specs=pl.BlockSpec((None, tile_rows, 30), lambda b, t: (b, t, 0)),
        ),
        compiler_params=pltpu.CompilerParams(
            # Independent row tiles / batches -> both v7x TensorCores can share.
            dimension_semantics=("parallel", "parallel"),
        ),
        cost_estimate=cost,
    )(x, w1_bf16, b1_2d, w2_f32, b2_2d, cs_table)

    # Free metadata reshape: (B, branch*time, 30) -> (B, branch, time*10, 3).
    return jnp.reshape(out, (B, max_branch, max_time * 10, 3))


def init_params(key, dim):
    k1, k2, k3, k4 = jax.random.split(key, 4)
    w1 = jax.random.normal(k1, (dim, 128), jnp.float32) * (1.0 / jnp.sqrt(dim))
    b1 = jax.random.normal(k2, (128,), jnp.float32) * 0.01
    w2 = jax.random.normal(k3, (128, 30), jnp.float32) * (1.0 / jnp.sqrt(128.0))
    b2 = jax.random.normal(k4, (30,), jnp.float32) * 0.01
    return w1, b1, w2, b2


def reference_forward(encoding, current_state, params, *, max_time, max_branch,
                      bf16_inputs=False):
    """Pure-JAX reference matching the PyTorch module semantics.

    bf16_inputs=True mimics the kernel's in-kernel bf16 cast of x / w1 (f32 accum),
    used for a tight numerical check of the kernel itself.
    """
    w1, b1, w2, b2 = params
    B = encoding.shape[0]
    dim = w1.shape[0]
    x = jnp.reshape(encoding, (B, max_branch, max_time, dim))
    if bf16_inputs:
        h = jnp.dot(x.astype(jnp.bfloat16), w1.astype(jnp.bfloat16),
                    preferred_element_type=jnp.float32)
    else:
        h = jnp.dot(x, w1, precision=lax.Precision.HIGHEST)
    h = h + b1
    h = jnp.where(h > 0, h, jnp.exp(h) - 1.0)
    y = jnp.dot(h, w2, precision=lax.Precision.HIGHEST) + b2
    traj = jnp.reshape(y, (B, max_branch, max_time * 10, 3))
    return traj + current_state[:, None, None, :3]


if __name__ == "__main__":
    B = 2
    max_branch = 4
    max_time = 8
    dim = 512  # module reshapes to (..., 512), so dim == 512

    key = jax.random.PRNGKey(0)
    k_enc, k_cs, k_par = jax.random.split(key, 3)

    encoding = jax.random.normal(k_enc, (B, max_branch * max_time, dim), jnp.float32)
    current_state = jax.random.normal(k_cs, (B, 5), jnp.float32)
    params = init_params(k_par, dim)

    out = agent_decoder_forward(
        encoding, current_state, params, max_time=max_time, max_branch=max_branch
    )
    out = jax.block_until_ready(out)
    assert out.shape == (B, max_branch, max_time * 10, 3), out.shape

    # Tight check vs a reference using the same bf16 first-matmul quantization.
    ref_q = reference_forward(
        encoding, current_state, params, max_time=max_time, max_branch=max_branch,
        bf16_inputs=True,
    )
    assert jnp.allclose(out, ref_q, atol=1e-2, rtol=1e-2), float(
        jnp.max(jnp.abs(out - ref_q))
    )

    # Loose check vs the full-f32 module semantics (bf16 quantization of x/w1).
    ref = reference_forward(
        encoding, current_state, params, max_time=max_time, max_branch=max_branch
    )
    max_err = float(jnp.max(jnp.abs(out - ref)))
    assert max_err < 0.1, max_err

    print("KERNEL_OK")
</pallas_src>

<mosaic_0001>
module attributes {stable_mosaic.version = 11 : i64} {
  func.func @_agent_decoder_kernel(%arg0: i32, %arg1: i32, %arg2: memref<1x32x512xf32, #tpu.memory_space<vmem>>, %arg3: memref<512x128xbf16, #tpu.memory_space<vmem>>, %arg4: memref<1x128xf32, #tpu.memory_space<vmem>>, %arg5: memref<128x30xf32, #tpu.memory_space<vmem>>, %arg6: memref<1x30xf32, #tpu.memory_space<vmem>>, %arg7: memref<1x1x30xf32, #tpu.memory_space<vmem>>, %arg8: memref<1x32x30xf32, #tpu.memory_space<vmem>>) attributes {dimension_semantics = [#tpu.dimension_semantics<parallel>, #tpu.dimension_semantics<parallel>], iteration_bounds = array<i64: 2, 1>, scalar_prefetch = 0 : i64, scratch_operands = 0 : i64, tpu.core_type = #tpu.core_type<tc>, window_params = [{transform_indices = @transform_0, window_bounds = array<i64: 1, 32, 512>}, {pipeline_mode = #tpu.pipeline_mode<synchronous>, transform_indices = @transform_1, window_bounds = array<i64: 512, 128>}, {pipeline_mode = #tpu.pipeline_mode<synchronous>, transform_indices = @transform_2, window_bounds = array<i64: 1, 128>}, {pipeline_mode = #tpu.pipeline_mode<synchronous>, transform_indices = @transform_3, window_bounds = array<i64: 128, 30>}, {pipeline_mode = #tpu.pipeline_mode<synchronous>, transform_indices = @transform_4, window_bounds = array<i64: 1, 30>}, {transform_indices = @transform_5, window_bounds = array<i64: 1, 1, 30>}, {transform_indices = @transform_6, window_bounds = array<i64: 1, 32, 30>}]} {
    %c0 = arith.constant 0 : index
    %c0_0 = arith.constant 0 : index
    %c0_1 = arith.constant 0 : index
    %0 = vector.load %arg2[%c0, %c0_0, %c0_1] : memref<1x32x512xf32, #tpu.memory_space<vmem>>, vector<1x32x512xf32>
    %1 = vector.shape_cast %0 : vector<1x32x512xf32> to vector<32x512xf32>
    %2 = arith.truncf %1 : vector<32x512xf32> to vector<32x512xbf16>
    %c0_2 = arith.constant 0 : index
    %c0_3 = arith.constant 0 : index
    %3 = vector.load %arg3[%c0_2, %c0_3] : memref<512x128xbf16, #tpu.memory_space<vmem>>, vector<512x128xbf16>
    %cst = arith.constant dense<0.000000e+00> : vector<32x128xf32>
    %4 = tpu.matmul %2, %3, %cst {dimension_numbers = #tpu.dot_dimension_numbers<[1], [0], [0], [1], [0, 0, 1, 1], [], []>} : vector<32x512xbf16>, vector<512x128xbf16>, vector<32x128xf32> -> vector<32x128xf32>
    %c0_4 = arith.constant 0 : index
    %c0_5 = arith.constant 0 : index
    %5 = vector.load %arg4[%c0_4, %c0_5] : memref<1x128xf32, #tpu.memory_space<vmem>>, vector<1x128xf32>
    %6 = vector.broadcast %5 : vector<1x128xf32> to vector<32x128xf32>
    %7 = arith.addf %4, %6 : vector<32x128xf32>
    %cst_6 = arith.constant 0.000000e+00 : f32
    %8 = vector.broadcast %cst_6 : f32 to vector<32x128xf32>
    %9 = arith.cmpf ogt, %7, %8 : vector<32x128xf32>
    %10 = math.exp %7 : vector<32x128xf32>
    %cst_7 = arith.constant 1.000000e+00 : f32
    %11 = vector.broadcast %cst_7 : f32 to vector<32x128xf32>
    %12 = arith.subf %10, %11 : vector<32x128xf32>
    %13 = arith.select %9, %7, %12 : vector<32x128xi1>, vector<32x128xf32>
    %c0_8 = arith.constant 0 : index
    %c0_9 = arith.constant 0 : index
    %14 = vector.load %arg5[%c0_8, %c0_9] : memref<128x30xf32, #tpu.memory_space<vmem>>, vector<128x30xf32>
    %cst_10 = arith.constant dense<0.000000e+00> : vector<32x30xf32>
    %15 = tpu.matmul %13, %14, %cst_10 {dimension_numbers = #tpu.dot_dimension_numbers<[1], [0], [0], [1], [0, 0, 1, 1], [], []>} : vector<32x128xf32>, vector<128x30xf32>, vector<32x30xf32> -> vector<32x30xf32>
    %c0_11 = arith.constant 0 : index
    %c0_12 = arith.constant 0 : index
    %16 = vector.load %arg6[%c0_11, %c0_12] : memref<1x30xf32, #tpu.memory_space<vmem>>, vector<1x30xf32>
    %17 = vector.broadcast %16 : vector<1x30xf32> to vector<32x30xf32>
    %18 = arith.addf %15, %17 : vector<32x30xf32>
    %c0_13 = arith.constant 0 : index
    %c0_14 = arith.constant 0 : index
    %c0_15 = arith.constant 0 : index
    %19 = vector.load %arg7[%c0_13, %c0_14, %c0_15] : memref<1x1x30xf32, #tpu.memory_space<vmem>>, vector<1x1x30xf32>
    %20 = vector.shape_cast %19 : vector<1x1x30xf32> to vector<1x30xf32>
    %21 = vector.broadcast %20 : vector<1x30xf32> to vector<32x30xf32>
    %22 = arith.addf %18, %21 : vector<32x30xf32>
    %c0_16 = arith.constant 0 : index
    %c0_17 = arith.constant 0 : index
    %c0_18 = arith.constant 0 : index
    %23 = vector.load %arg8[%c0_16, %c0_17, %c0_18] : memref<1x32x30xf32, #tpu.memory_space<vmem>>, vector<1x32x30xf32>
    %24 = vector.shape_cast %23 : vector<1x32x30xf32> to vector<32x30xf32>
    %25 = vector.shape_cast %22 : vector<32x30xf32> to vector<1x32x30xf32>
    tpu.vector_store %arg8[%c0_16, %c0_17, %c0_18], %25 {strides = array<i32>} : memref<1x32x30xf32, #tpu.memory_space<vmem>>, vector<1x32x30xf32>,
    return
  }
  func.func @transform_0(%arg0: i32, %arg1: i32) -> (i32, i32, i32) {
    %c0_i32 = arith.constant 0 : i32
    %c0_i32_0 = arith.constant 0 : i32
    return %arg0, %arg1, %c0_i32 : i32, i32, i32
  }
  func.func @transform_1(%arg0: i32, %arg1: i32) -> (i32, i32) {
    %c0_i32 = arith.constant 0 : i32
    %c0_i32_0 = arith.constant 0 : i32
    %c0_i32_1 = arith.constant 0 : i32
    return %c0_i32, %c0_i32_0 : i32, i32
  }
  func.func @transform_2(%arg0: i32, %arg1: i32) -> (i32, i32) {
    %c0_i32 = arith.constant 0 : i32
    %c0_i32_0 = arith.constant 0 : i32
    %c0_i32_1 = arith.constant 0 : i32
    return %c0_i32, %c0_i32_0 : i32, i32
  }
  func.func @transform_3(%arg0: i32, %arg1: i32) -> (i32, i32) {
    %c0_i32 = arith.constant 0 : i32
    %c0_i32_0 = arith.constant 0 : i32
    %c0_i32_1 = arith.constant 0 : i32
    return %c0_i32, %c0_i32_0 : i32, i32
  }
  func.func @transform_4(%arg0: i32, %arg1: i32) -> (i32, i32) {
    %c0_i32 = arith.constant 0 : i32
    %c0_i32_0 = arith.constant 0 : i32
    %c0_i32_1 = arith.constant 0 : i32
    return %c0_i32, %c0_i32_0 : i32, i32
  }
  func.func @transform_5(%arg0: i32, %arg1: i32) -> (i32, i32, i32) {
    %c0_i32 = arith.constant 0 : i32
    %c0_i32_0 = arith.constant 0 : i32
    %c0_i32_1 = arith.constant 0 : i32
    return %arg0, %c0_i32, %c0_i32_0 : i32, i32, i32
  }
  func.func @transform_6(%arg0: i32, %arg1: i32) -> (i32, i32, i32) {
    %c0_i32 = arith.constant 0 : i32
    %c0_i32_0 = arith.constant 0 : i32
    return %arg0, %arg1, %c0_i32 : i32, i32, i32
  }
}

</mosaic_0001>

<llo_original>
// kernel: tpu_custom_call.1
$region0: #{tpu_custom_call.1}
  #allocation0 [shape = 'u32[]', space=smem, size = 0x4, offset = 0x4, fixed_abs, tag = 'smem constant byte address 0x4 - core index']
  #allocation1 [shape = 'u32[72,128]{1,0:T(1,128)}', space=vmem, size = 0x9000, scoped, tag = 'internal scratch']
  %s0 = inlined_call_operand.hbm [shape: f32[2,32,512], index: 0, kind: input, shape index: {}]
  %s1 = inlined_call_operand.hbm [shape: bf16[512,128], index: 1, kind: input, shape index: {}]
  %s2 = inlined_call_operand.vmem [shape: f32[1,128], index: 2, kind: input, shape index: {}]
  %s3 = inlined_call_operand.vmem [shape: f32[128,30], index: 3, kind: input, shape index: {}]
  %s4 = inlined_call_operand.vmem [shape: f32[1,30], index: 4, kind: input, shape index: {}]
  %s5 = inlined_call_operand.vmem [shape: f32[2,1,30], index: 5, kind: input, shape index: {}]
  %s6 = inlined_call_operand.vmem [shape: f32[2,32,30], index: 6, kind: output, shape index: {}]
  %s7 = sld [smem:[#allocation0]]
  $region65: #{tpu_custom_call.1} parent=0
    _
  %s9 = ssub.s32 1, %s7
  %s10 = scalar_select 0, %s9, %s7
  $region1: #{tpu_custom_call.1} parent=0
    #allocation2 [shape = 'u8[131072]{0}', space=vmem, size = 0x20000, scoped, tag = 'input window, operand 0']
    #allocation3 [shape = 's32[2]{0}', space=sflag, size = 0x8, scoped, tag = 'scoped memory for tpu_custom_call.1']
    #allocation4 [shape = 'u8[131072]{0}', space=vmem, size = 0x20000, scoped, tag = 'input window, operand 1, single buffered']
    #allocation5 [shape = 's32[1]{0}', space=sflag, size = 0x4, scoped, tag = 'scoped memory for tpu_custom_call.1']
    %11 = vsyncpa [#allocation3], 0
    %s12 = scalar_lea.sflag [#allocation3], 1
    %13 = vsyncpa %s12, 0
    %14 = vsyncpa [#allocation5], 0
    loop: start=0, step=1, limit=4
    $region2: #{tpu_custom_call.1} parent=1 // loop_pre_header
      _
    $region3: #{tpu_custom_call.1} parent=1 // loop_header
      %s16 = sphi 0, %s20
      %p17 = scmp.ge.s32.totalorder %s16, 4
      %s23 = sphi 0, %s35
      %s24 = sphi 0, %s31
      %s25 = sphi 0, %s23
      %s26 = sphi 0, %s24
      %s27 = sphi 0, %s25
      %s28 = sphi 0, %s26
      %s40 = sphi 0, %s42
      %s43 = sphi 0, %s40
      %s44 = sphi 0, %s43
      %s60 = sphi 0, %s44
      %s64 = sphi 0, %s64
      %s66 = sphi 0, %s64
      %s67 = sphi 0, %s66
      %s81 = sphi 0, %s67
      %s85 = sphi 0, %s85
      %s87 = sphi 0, %s85
      %s88 = sphi 0, %s87
      %s102 = sphi 0, %s88
      %s106 = sphi 0, %s106
      %s108 = sphi 0, %s106
      %s109 = sphi 0, %s108
      %s123 = sphi 0, %s109
      %s127 = sphi 0, %s127
      %s129 = sphi 0, %s127
      %s130 = sphi 0, %s129
      %s144 = sphi 0, %s130
      %s150 = sphi 0, %s152
      %s153 = sphi 0, %s150
      %s154 = sphi 0, %s153
      %s170 = sphi 0, %s154
      %s178 = sphi 0, %s180
      %s181 = sphi 0, %s178
      %s182 = sphi 0, %s181
      %s198 = sphi 0, %s182
    $region4: #{tpu_custom_call.1} parent=1 // loop_header_branch
      %19 = sbr.rel (%p17) target = $region8
    $region5: #{tpu_custom_call.1} parent=1 // loop_body
      %s21 = ssub.s32 %s16, 1
      %s22 = ssub.s32 %s16, 2
      %s29 = sadd.s32 1, %s24
      %p30 = scmp.ge.s32.totalorder %s29, 1
      %s31 = scalar_select %p30, 0, %s29
      %s32 = sadd.s32 1, %s23
      %s33 = scalar_select %p30, %s32, %s23
      %p34 = scmp.ge.s32.totalorder %s33, 2
      %s35 = scalar_select %p34, 0, %s33
      %s36 = ssub.s32 %s23, %s35
      %s37 = ssub.s32 %s24, %s31
      %s38 = sor.u32 %s36, %s37
      %p39 = scmp.eq.s32.totalorder %s38, 0
      %s41 = sadd.s32 %s40, 1
      %s42 = scalar_select %p39, %s40, %s41
      %p45 = pneg %p39
      %p46 = scmp.eq.s32.totalorder %s16, 1
      %p47 = por %p45, %p46
      %p48 = scmp.ne.s32.totalorder %s40, %s43
      %p49 = scmp.eq.s32.totalorder %s16, 0
      %p50 = por %p48, %p49
      %p51 = scmp.ne.s32.totalorder %s40, %s43
      %p52 = scmp.eq.s32.totalorder %s21, 1
      %p53 = por %p51, %p52
      %p54 = scmp.ne.s32.totalorder %s43, %s44
      %p55 = scmp.eq.s32.totalorder %s21, 0
      %p56 = por %p54, %p55
      %p57 = scmp.ne.s32.totalorder %s43, %s44
      %p58 = scmp.eq.s32.totalorder %s22, 1
      %p59 = por %p57, %p58
      %p61 = scmp.ne.s32.totalorder %s44, %s60
      %p62 = scmp.eq.s32.totalorder %s22, 0
      %p63 = por %p61, %p62
      %s65 = sadd.s32 %s64, 1
      %p68 = scmp.eq.s32.totalorder %s16, 1
      %p69 = scmp.ne.s32.totalorder %s64, %s66
      %p70 = scmp.eq.s32.totalorder %s16, 0
      %p71 = por %p69, %p70
      %p72 = scmp.ne.s32.totalorder %s64, %s66
      %p73 = scmp.eq.s32.totalorder %s21, 1
      %p74 = por %p72, %p73
      %p75 = scmp.ne.s32.totalorder %s66, %s67
      %p76 = scmp.eq.s32.totalorder %s21, 0
      %p77 = por %p75, %p76
      %p78 = scmp.ne.s32.totalorder %s66, %s67
      %p79 = scmp.eq.s32.totalorder %s22, 1
      %p80 = por %p78, %p79
      %p82 = scmp.ne.s32.totalorder %s67, %s81
      %p83 = scmp.eq.s32.totalorder %s22, 0
      %p84 = por %p82, %p83
      %s86 = sadd.s32 %s85, 1
      %p89 = scmp.eq.s32.totalorder %s16, 1
      %p90 = scmp.ne.s32.totalorder %s85, %s87
      %p91 = scmp.eq.s32.totalorder %s16, 0
      %p92 = por %p90, %p91
      %p93 = scmp.ne.s32.totalorder %s85, %s87
      %p94 = scmp.eq.s32.totalorder %s21, 1
      %p95 = por %p93, %p94
      %p96 = scmp.ne.s32.totalorder %s87, %s88
      %p97 = scmp.eq.s32.totalorder %s21, 0
      %p98 = por %p96, %p97
      %p99 = scmp.ne.s32.totalorder %s87, %s88
      %p100 = scmp.eq.s32.totalorder %s22, 1
      %p101 = por %p99, %p100
      %p103 = scmp.ne.s32.totalorder %s88, %s102
      %p104 = scmp.eq.s32.totalorder %s22, 0
      %p105 = por %p103, %p104
      %s107 = sadd.s32 %s106, 1
      %p110 = scmp.eq.s32.totalorder %s16, 1
      %p111 = scmp.ne.s32.totalorder %s106, %s108
      %p112 = scmp.eq.s32.totalorder %s16, 0
      %p113 = por %p111, %p112
      %p114 = scmp.ne.s32.totalorder %s106, %s108
      %p115 = scmp.eq.s32.totalorder %s21, 1
      %p116 = por %p114, %p115
      %p117 = scmp.ne.s32.totalorder %s108, %s109
      %p118 = scmp.eq.s32.totalorder %s21, 0
      %p119 = por %p117, %p118
      %p120 = scmp.ne.s32.totalorder %s108, %s109
      %p121 = scmp.eq.s32.totalorder %s22, 1
      %p122 = por %p120, %p121
      %p124 = scmp.ne.s32.totalorder %s109, %s123
      %p125 = scmp.eq.s32.totalorder %s22, 0
      %p126 = por %p124, %p125
      %s128 = sadd.s32 %s127, 1
      %p131 = scmp.eq.s32.totalorder %s16, 1
      %p132 = scmp.ne.s32.totalorder %s127, %s129
      %p133 = scmp.eq.s32.totalorder %s16, 0
      %p134 = por %p132, %p133
      %p135 = scmp.ne.s32.totalorder %s127, %s129
      %p136 = scmp.eq.s32.totalorder %s21, 1
      %p137 = por %p135, %p136
      %p138 = scmp.ne.s32.totalorder %s129, %s130
      %p139 = scmp.eq.s32.totalorder %s21, 0
      %p140 = por %p138, %p139
      %p141 = scmp.ne.s32.totalorder %s129, %s130
      %p142 = scmp.eq.s32.totalorder %s22, 1
      %p143 = por %p141, %p142
      %p145 = scmp.ne.s32.totalorder %s130, %s144
      %p146 = scmp.eq.s32.totalorder %s22, 0
      %p147 = por %p145, %p146
      %s148 = ssub.s32 %s23, %s35
      %p149 = scmp.eq.s32.totalorder %s148, 0
      %s151 = sadd.s32 %s150, 1
      %s152 = scalar_select %p149, %s150, %s151
      %p155 = pneg %p149
      %p156 = scmp.eq.s32.totalorder %s16, 1
      %p157 = por %p155, %p156
      %p158 = scmp.ne.s32.totalorder %s150, %s153
      %p159 = scmp.eq.s32.totalorder %s16, 0
      %p160 = por %p158, %p159
      %p161 = scmp.ne.s32.totalorder %s150, %s153
      %p162 = scmp.eq.s32.totalorder %s21, 1
      %p163 = por %p161, %p162
      %p164 = scmp.ne.s32.totalorder %s153, %s154
      %p165 = scmp.eq.s32.totalorder %s21, 0
      %p166 = por %p164, %p165
      %p167 = scmp.ne.s32.totalorder %s153, %s154
      %p168 = scmp.eq.s32.totalorder %s22, 1
      %p169 = por %p167, %p168
      %p171 = scmp.ne.s32.totalorder %s154, %s170
      %p172 = scmp.eq.s32.totalorder %s22, 0
      %p173 = por %p171, %p172
      %s174 = ssub.s32 %s23, %s35
      %s175 = ssub.s32 %s24, %s31
      %s176 = sor.u32 %s174, %s175
      %p177 = scmp.eq.s32.totalorder %s176, 0
      %s179 = sadd.s32 %s178, 1
      %s180 = scalar_select %p177, %s178, %s179
      %p183 = pneg %p177
      %p184 = scmp.eq.s32.totalorder %s16, 1
      %p185 = por %p183, %p184
      %p186 = scmp.ne.s32.totalorder %s178, %s181
      %p187 = scmp.eq.s32.totalorder %s16, 0
      %p188 = por %p186, %p187
      %p189 = scmp.ne.s32.totalorder %s178, %s181
      %p190 = scmp.eq.s32.totalorder %s21, 1
      %p191 = por %p189, %p190
      %p192 = scmp.ne.s32.totalorder %s181, %s182
      %p193 = scmp.eq.s32.totalorder %s21, 0
      %p194 = por %p192, %p193
      %p195 = scmp.ne.s32.totalorder %s181, %s182
      %p196 = scmp.eq.s32.totalorder %s22, 1
      %p197 = por %p195, %p196
      %p199 = scmp.ne.s32.totalorder %s182, %s198
      %p200 = scmp.eq.s32.totalorder %s22, 0
      %p201 = por %p199, %p200
      %p202 = scmp.le.s32.totalorder 1, %s16
      %p203 = scmp.lt.s32.totalorder %s16, 3
      %p204 = pnand %p202, %p203
      %p205 = pneg %p204
      // Predicated region
      $region9: #{tpu_custom_call.1} parent=5 // pred_check
        _
      $region10: #{tpu_custom_call.1} parent=5 // pred_check_branch
        %207 = sbr.rel (%p204) target = $region12
      $region11: #{tpu_custom_call.1} parent=5 // pred_region
        %s208 = ssub.s32 %s16, 1
        // Predicated region
        $region13: #{tpu_custom_call.1} parent=11 // pred_check
          %p209 = pneg %p77
        $region14: #{tpu_custom_call.1} parent=11 // pred_check_branch
          %211 = sbr.rel (%p209) target = $region16
        $region15: #{tpu_custom_call.1} parent=11 // pred_region
          %213 = vsyncadd [#allocation5], 0
          %s214 = sshll.u32 %s1, 4
          %s215 = int_to_ptr.hbm [resolvable:$true] %s214
          %s216 = sshll.u32 [#allocation4], 4
          %s217 = int_to_ptr.vmem [resolvable:$true] %s216
          %222 = dma.hbm_to_vmem [thread:$0]  %s215, 4096, %s217, [#allocation5], 64, 64, 4
        $region16: #{tpu_custom_call.1} parent=11 // pred_fallthru
          _
        // Predicated region
        $region17: #{tpu_custom_call.1} parent=11 // pred_check
          %p223 = pneg %p98
        $region18: #{tpu_custom_call.1} parent=11 // pred_check_branch
          %225 = sbr.rel (%p223) target = $region20
        $region19: #{tpu_custom_call.1} parent=11 // pred_region
          _
        $region20: #{tpu_custom_call.1} parent=11 // pred_fallthru
          _
        // Predicated region
        $region21: #{tpu_custom_call.1} parent=11 // pred_check
          %p226 = pneg %p119
        $region22: #{tpu_custom_call.1} parent=11 // pred_check_branch
          %228 = sbr.rel (%p226) target = $region24
        $region23: #{tpu_custom_call.1} parent=11 // pred_region
          _
        $region24: #{tpu_custom_call.1} parent=11 // pred_fallthru
          _
        // Predicated region
        $region25: #{tpu_custom_call.1} parent=11 // pred_check
          %p229 = pneg %p140
        $region26: #{tpu_custom_call.1} parent=11 // pred_check_branch
          %231 = sbr.rel (%p229) target = $region28
        $region27: #{tpu_custom_call.1} parent=11 // pred_region
          _
        $region28: #{tpu_custom_call.1} parent=11 // pred_fallthru
          _
      $region12: #{tpu_custom_call.1} parent=5 // pred_fallthru
        _
      %p232 = scmp.lt.s32.totalorder %s16, 2
      // Predicated region
      $region29: #{tpu_custom_call.1} parent=5 // pred_check
        %p233 = pneg %p232
      $region30: #{tpu_custom_call.1} parent=5 // pred_check_branch
        %235 = sbr.rel (%p233) target = $region32
      $region31: #{tpu_custom_call.1} parent=5 // pred_region
        // Predicated region
        $region33: #{tpu_custom_call.1} parent=31 // pred_check
          %p236 = pneg %p50
        $region34: #{tpu_custom_call.1} parent=31 // pred_check_branch
          %238 = sbr.rel (%p236) target = $region36
        $region35: #{tpu_custom_call.1} parent=31 // pred_region
          %s239 = sand.u32 %s40, 1
          %s240 = scalar_lea.sflag [#allocation3], %s239
          %s241 = sand.u32 %s40, 1
          %s242 = smul.addr %s241, 128
          %s243 = scalar_lea.vmem [#allocation2], %s242
          %s244 = smul.u32 4, %s24
          %246 = vsyncadd %s240, 0
          %s247 = smul.addr %s244, 4
          %s248 = smul.addr %s23, 16
          %s249 = sadd.s32 %s247, %s248
          %s250 = smul.addr %s249, 8
          %s251 = scalar_lea.hbm %s0, %s250
          %s252 = sshll.u32 %s251, 4
          %s253 = int_to_ptr.hbm [resolvable:$true] %s252
          %s254 = sshll.u32 %s243, 4
          %s255 = int_to_ptr.vmem [resolvable:$true] %s254
          %260 = dma.hbm_to_vmem [thread:$0]  %s253, 2048, %s255, %s240, 512, 512, 32
        $region36: #{tpu_custom_call.1} parent=31 // pred_fallthru
          _
        // Predicated region
        $region37: #{tpu_custom_call.1} parent=31 // pred_check
          %p261 = pneg %p160
        $region38: #{tpu_custom_call.1} parent=31 // pred_check_branch
          %263 = sbr.rel (%p261) target = $region40
        $region39: #{tpu_custom_call.1} parent=31 // pred_region
          %p264 = scmp.lt.s32.totalorder %s23, 1
          %s265 = scalar_select %p264, %s23, 1
          %s266 = scalar_lea.vmem %s5, %s265
        $region40: #{tpu_custom_call.1} parent=31 // pred_fallthru
          _
      $region32: #{tpu_custom_call.1} parent=5 // pred_fallthru
        _
      %p267 = scmp.le.s32.totalorder 1, %s16
      %p268 = scmp.lt.s32.totalorder %s16, 3
      %p269 = pnand %p267, %p268
      %p270 = pneg %p269
      // Predicated region
      $region41: #{tpu_custom_call.1} parent=5 // pred_check
        _
      $region42: #{tpu_custom_call.1} parent=5 // pred_check_branch
        %272 = sbr.rel (%p269) target = $region44
      $region43: #{tpu_custom_call.1} parent=5 // pred_region
        %s273 = ssub.s32 %s16, 1
        %s274 = sand.u32 %s43, 1
        %s275 = scalar_lea.sflag [#allocation3], %s274
        %s276 = sand.u32 %s43, 1
        %s277 = smul.addr %s276, 128
        %s278 = scalar_lea.vmem [#allocation2], %s277
        // Predicated region
        $region45: #{tpu_custom_call.1} parent=43 // pred_check
          %p279 = pneg %p56
        $region46: #{tpu_custom_call.1} parent=43 // pred_check_branch
          %281 = sbr.rel (%p279) target = $region48
        $region47: #{tpu_custom_call.1} parent=43 // pred_region
          %283 = dma.done %s275, 2048
        $region48: #{tpu_custom_call.1} parent=43 // pred_fallthru
          _
        // Predicated region
        $region49: #{tpu_custom_call.1} parent=43 // pred_check
          %p284 = pneg %p77
        $region50: #{tpu_custom_call.1} parent=43 // pred_check_branch
          %286 = sbr.rel (%p284) target = $region52
        $region51: #{tpu_custom_call.1} parent=43 // pred_region
          %288 = dma.done [#allocation5], 4096
        $region52: #{tpu_custom_call.1} parent=43 // pred_fallthru
          _
        %s289 = sand.u32 %s43, 1
        %s290 = scalar_lea.sflag [#allocation3], %s289
        %s291 = sand.u32 %s43, 1
        %s292 = smul.addr %s291, 128
        %s293 = scalar_lea.vmem [#allocation2], %s292
        %p294 = pneg %p56
        %p295 = pneg %p53
        %p296 = pneg %p77
        %p297 = pneg %p74
        %p298 = pneg %p98
        %p299 = pneg %p95
        %p300 = pneg %p119
        %p301 = pneg %p116
        %p302 = pneg %p140
        %p303 = pneg %p137
        %p304 = scmp.lt.s32.totalorder %s25, 1
        %s305 = scalar_select %p304, %s25, 1
        %s306 = scalar_lea.vmem %s5, %s305
        %p307 = pneg %p166
        %p308 = pneg %p163
        %p309 = pneg %p194
        %p310 = pneg %p191
        %s311 = smul.u32 4, %s26
        %p312 = scmp.lt.s32.totalorder %s25, 1
        %s313 = scalar_select %p312, %s25, 1
        %p314 = scmp.lt.s32.totalorder %s311, 3
        %s315 = scalar_select %p314, %s311, 3
        %s316 = smul.addr %s313, 4
        %s317 = sadd.s32 %s315, %s316
        %s318 = smul.addr %s317, 8
        %s319 = scalar_lea.vmem %s6, %s318
        %s320 = smul.u32 4, %s26
        %p321 = scmp.lt.s32.totalorder %s25, 1
        %s322 = scalar_select %p321, %s25, 1
        %s323 = scalar_lea.vmem %s5, %s322
        %s324 = smul.u32 4, %s26
        %p325 = scmp.lt.s32.totalorder %s25, 1
        %s326 = scalar_select %p325, %s25, 1
        %p327 = scmp.lt.s32.totalorder %s324, 3
        %s328 = scalar_select %p327, %s324, 3
        %s329 = smul.addr %s326, 4
        %s330 = sadd.s32 %s328, %s329
        %s331 = smul.addr %s330, 8
        %s332 = scalar_lea.vmem %s6, %s331
        %s333 = smul.u32 4, %s26
        %v334 = vld [vmem:[%s278] sm:$0xff]
        %v335 = vld [vmem:[%s278 + $0x8] sm:$0xff]
        %v336 = vld [vmem:[%s278 + $0x10] sm:$0xff]
        %v337 = vld [vmem:[%s278 + $0x18] sm:$0xff]
        %v338 = vld [vmem:[%s278 + $0x20] sm:$0xff]
        %v339 = vld [vmem:[%s278 + $0x28] sm:$0xff]
        %v340 = vld [vmem:[%s278 + $0x30] sm:$0xff]
        %v341 = vld [vmem:[%s278 + $0x38] sm:$0xff]
        %v342 = vld [vmem:[%s278 + $0x40] sm:$0xff]
        %v343 = vld [vmem:[%s278 + $0x48] sm:$0xff]
        %v344 = vld [vmem:[%s278 + $0x50] sm:$0xff]
        %v345 = vld [vmem:[%s278 + $0x58] sm:$0xff]
        %v346 = vld [vmem:[%s278 + $0x60] sm:$0xff]
        %v347 = vld [vmem:[%s278 + $0x68] sm:$0xff]
        %v348 = vld [vmem:[%s278 + $0x70] sm:$0xff]
        %v349 = vld [vmem:[%s278 + $0x78] sm:$0xff]
        %v350 = vpack.c.bf16 %v338, %v334
        %v351 = vpack.c.bf16 %v339, %v335
        %v352 = vpack.c.bf16 %v340, %v336
        %v353 = vpack.c.bf16 %v341, %v337
        %v354 = vpack.c.bf16 %v346, %v342
        %v355 = vpack.c.bf16 %v347, %v343
        %v356 = vpack.c.bf16 %v348, %v344
        %v357 = vpack.c.bf16 %v349, %v345
        %v358 = vld [vmem:[#allocation4] sm:$0xf]
        %v359 = vld [vmem:[#allocation4 + $0x4] sm:$0xf]
        %v360 = vld [vmem:[#allocation4 + $0x8] sm:$0xf]
        %v361 = vld [vmem:[#allocation4 + $0xc] sm:$0xf]
        %v362 = vld [vmem:[#allocation4 + $0x10] sm:$0xf]
        %v363 = vld [vmem:[#allocation4 + $0x14] sm:$0xf]
        %v364 = vld [vmem:[#allocation4 + $0x18] sm:$0xf]
        %v365 = vld [vmem:[#allocation4 + $0x1c] sm:$0xf]
        %v366 = vld [vmem:[#allocation4 + $0x20] sm:$0xf]
        %v367 = vld [vmem:[#allocation4 + $0x24] sm:$0xf]
        %v368 = vld [vmem:[#allocation4 + $0x28] sm:$0xf]
        %v369 = vld [vmem:[#allocation4 + $0x2c] sm:$0xf]
        %v370 = vld [vmem:[#allocation4 + $0x30] sm:$0xf]
        %v371 = vld [vmem:[#allocation4 + $0x34] sm:$0xf]
        %v372 = vld [vmem:[#allocation4 + $0x38] sm:$0xf]
        %v373 = vld [vmem:[#allocation4 + $0x3c] sm:$0xf]
        %v374 = vld [vmem:[#allocation4 + $0x40] sm:$0xf]
        %v375 = vld [vmem:[#allocation4 + $0x44] sm:$0xf]
        %v376 = vld [vmem:[#allocation4 + $0x48] sm:$0xf]
        %v377 = vld [vmem:[#allocation4 + $0x4c] sm:$0xf]
        %v378 = vld [vmem:[#allocation4 + $0x50] sm:$0xf]
        %v379 = vld [vmem:[#allocation4 + $0x54] sm:$0xf]
        %v380 = vld [vmem:[#allocation4 + $0x58] sm:$0xf]
        %v381 = vld [vmem:[#allocation4 + $0x5c] sm:$0xf]
        %v382 = vld [vmem:[#allocation4 + $0x60] sm:$0xf]
        %v383 = vld [vmem:[#allocation4 + $0x64] sm:$0xf]
        %v384 = vld [vmem:[#allocation4 + $0x68] sm:$0xf]
        %v385 = vld [vmem:[#allocation4 + $0x6c] sm:$0xf]
        %v386 = vld [vmem:[#allocation4 + $0x70] sm:$0xf]
        %v387 = vld [vmem:[#allocation4 + $0x74] sm:$0xf]
        %v388 = vld [vmem:[#allocation4 + $0x78] sm:$0xf]
        %v389 = vld [vmem:[#allocation4 + $0x7c] sm:$0xf]
        %v390 = vld [vmem:[#allocation4 + $0x80] sm:$0xf]
        %v391 = vld [vmem:[#allocation4 + $0x84] sm:$0xf]
        %v392 = vld [vmem:[#allocation4 + $0x88] sm:$0xf]
        %v393 = vld [vmem:[#allocation4 + $0x8c] sm:$0xf]
        %v394 = vld [vmem:[#allocation4 + $0x90] sm:$0xf]
        %v395 = vld [vmem:[#allocation4 + $0x94] sm:$0xf]
        %v396 = vld [vmem:[#allocation4 + $0x98] sm:$0xf]
        %v397 = vld [vmem:[#allocation4 + $0x9c] sm:$0xf]
        %v398 = vld [vmem:[#allocation4 + $0xa0] sm:$0xf]
        %v399 = vld [vmem:[#allocation4 + $0xa4] sm:$0xf]
        %v400 = vld [vmem:[#allocation4 + $0xa8] sm:$0xf]
        %v401 = vld [vmem:[#allocation4 + $0xac] sm:$0xf]
        %v402 = vld [vmem:[#allocation4 + $0xb0] sm:$0xf]
        %v403 = vld [vmem:[#allocation4 + $0xb4] sm:$0xf]
        %v404 = vld [vmem:[#allocation4 + $0xb8] sm:$0xf]
        %v405 = vld [vmem:[#allocation4 + $0xbc] sm:$0xf]
        %v406 = vld [vmem:[#allocation4 + $0xc0] sm:$0xf]
        %v407 = vld [vmem:[#allocation4 + $0xc4] sm:$0xf]
        %v408 = vld [vmem:[#allocation4 + $0xc8] sm:$0xf]
        %v409 = vld [vmem:[#allocation4 + $0xcc] sm:$0xf]
        %v410 = vld [vmem:[#allocation4 + $0xd0] sm:$0xf]
        %v411 = vld [vmem:[#allocation4 + $0xd4] sm:$0xf]
        %v412 = vld [vmem:[#allocation4 + $0xd8] sm:$0xf]
        %v413 = vld [vmem:[#allocation4 + $0xdc] sm:$0xf]
        %v414 = vld [vmem:[#allocation4 + $0xe0] sm:$0xf]
        %v415 = vld [vmem:[#allocation4 + $0xe4] sm:$0xf]
        %v416 = vld [vmem:[#allocation4 + $0xe8] sm:$0xf]
        %v417 = vld [vmem:[#allocation4 + $0xec] sm:$0xf]
        %v418 = vld [vmem:[#allocation4 + $0xf0] sm:$0xf]
        %v419 = vld [vmem:[#allocation4 + $0xf4] sm:$0xf]
        %v420 = vld [vmem:[#allocation4 + $0xf8] sm:$0xf]
        %v421 = vld [vmem:[#allocation4 + $0xfc] sm:$0xf]
        %v422 = vld [vmem:[%s2] sm:$0x1]
        %v424 = vperm.slane %v422, 0
        %v490 = vunpack.c.l.b16 %v358
        %v491 = vunpack.c.l.b16 %v359
        %v492 = vunpack.c.l.b16 %v360
        %v493 = vunpack.c.l.b16 %v361
        %v494 = vunpack.c.l.b16 %v362
        %v495 = vunpack.c.l.b16 %v363
        %v496 = vunpack.c.l.b16 %v364
        %v497 = vunpack.c.l.b16 %v365
        %v498 = vunpack.c.l.b16 %v366
        %v499 = vunpack.c.l.b16 %v367
        %v500 = vunpack.c.l.b16 %v368
        %v501 = vunpack.c.l.b16 %v369
        %v502 = vunpack.c.l.b16 %v370
        %v503 = vunpack.c.l.b16 %v371
        %v504 = vunpack.c.l.b16 %v372
        %v505 = vunpack.c.l.b16 %v373
        %v506 = vunpack.c.l.b16 %v374
        %v507 = vunpack.c.l.b16 %v375
        %v508 = vunpack.c.l.b16 %v376
        %v509 = vunpack.c.l.b16 %v377
        %v510 = vunpack.c.l.b16 %v378
        %v511 = vunpack.c.l.b16 %v379
        %v512 = vunpack.c.l.b16 %v380
        %v513 = vunpack.c.l.b16 %v381
        %v514 = vunpack.c.l.b16 %v382
        %v515 = vunpack.c.l.b16 %v383
        %v516 = vunpack.c.l.b16 %v384
        %v517 = vunpack.c.l.b16 %v385
        %v518 = vunpack.c.l.b16 %v386
        %v519 = vunpack.c.l.b16 %v387
        %v520 = vunpack.c.l.b16 %v388
        %v521 = vunpack.c.l.b16 %v389
        %v522 = vunpack.c.l.b16 %v390
        %v523 = vunpack.c.l.b16 %v391
        %v524 = vunpack.c.l.b16 %v392
        %v525 = vunpack.c.l.b16 %v393
        %v526 = vunpack.c.l.b16 %v394
        %v527 = vunpack.c.l.b16 %v395
        %v528 = vunpack.c.l.b16 %v396
        %v529 = vunpack.c.l.b16 %v397
        %v530 = vunpack.c.l.b16 %v398
        %v531 = vunpack.c.l.b16 %v399
        %v532 = vunpack.c.l.b16 %v400
        %v533 = vunpack.c.l.b16 %v401
        %v534 = vunpack.c.l.b16 %v402
        %v535 = vunpack.c.l.b16 %v403
        %v536 = vunpack.c.l.b16 %v404
        %v537 = vunpack.c.l.b16 %v405
        %v538 = vunpack.c.l.b16 %v406
        %v539 = vunpack.c.l.b16 %v407
        %v540 = vunpack.c.l.b16 %v408
        %v541 = vunpack.c.l.b16 %v409
        %v542 = vunpack.c.l.b16 %v410
        %v543 = vunpack.c.l.b16 %v411
        %v544 = vunpack.c.l.b16 %v412
        %v545 = vunpack.c.l.b16 %v413
        %v546 = vunpack.c.l.b16 %v414
        %v547 = vunpack.c.l.b16 %v415
        %v548 = vunpack.c.l.b16 %v416
        %v549 = vunpack.c.l.b16 %v417
        %v550 = vunpack.c.l.b16 %v418
        %v551 = vunpack.c.l.b16 %v419
        %v552 = vunpack.c.l.b16 %v420
        %v553 = vunpack.c.l.b16 %v421
        %v554 = vpack.c.b16 %v491, %v490
        %v555 = vpack.c.b16 %v493, %v492
        %v556 = vpack.c.b16 %v495, %v494
        %v557 = vpack.c.b16 %v497, %v496
        %v558 = vpack.c.b16 %v499, %v498
        %v559 = vpack.c.b16 %v501, %v500
        %v560 = vpack.c.b16 %v503, %v502
        %v561 = vpack.c.b16 %v505, %v504
        %v562 = vpack.c.b16 %v507, %v506
        %v563 = vpack.c.b16 %v509, %v508
        %v564 = vpack.c.b16 %v511, %v510
        %v565 = vpack.c.b16 %v513, %v512
        %v566 = vpack.c.b16 %v515, %v514
        %v567 = vpack.c.b16 %v517, %v516
        %v568 = vpack.c.b16 %v519, %v518
        %v569 = vpack.c.b16 %v521, %v520
        %v570 = vpack.c.b16 %v523, %v522
        %v571 = vpack.c.b16 %v525, %v524
        %v572 = vpack.c.b16 %v527, %v526
        %v573 = vpack.c.b16 %v529, %v528
        %v574 = vpack.c.b16 %v531, %v530
        %v575 = vpack.c.b16 %v533, %v532
        %v576 = vpack.c.b16 %v535, %v534
        %v577 = vpack.c.b16 %v537, %v536
        %v578 = vpack.c.b16 %v539, %v538
        %v579 = vpack.c.b16 %v541, %v540
        %v580 = vpack.c.b16 %v543, %v542
        %v581 = vpack.c.b16 %v545, %v544
        %v582 = vpack.c.b16 %v547, %v546
        %v583 = vpack.c.b16 %v549, %v548
        %v584 = vpack.c.b16 %v551, %v550
        %v585 = vpack.c.b16 %v553, %v552
        %618 = vmatpush.bf16.msra.mxu0 %v561
        %619 = vmatpush.bf16.msra.mxu0 %v560
        %620 = vmatpush.bf16.msra.mxu0 %v559
        %621 = vmatpush.bf16.msra.mxu0 %v558
        %622 = vmatpush.bf16.msra.mxu0 %v557
        %623 = vmatpush.bf16.msra.mxu0 %v556
        %624 = vmatpush.bf16.msra.mxu0 %v555
        %625 = vmatpush.bf16.msra.mxu0 %v554
        %626 = vmatmul.bf16.gmra.mxu0 %v350
        %v627 = vpop.f32.mrf.mxu0
        %v628 = vadd.f32 %v424, %v627
        %v629 = vpop.f32.mrf.mxu0
        %v630 = vadd.f32 %v424, %v629
        %631 = vmatmul.bf16.gmra.mxu0 %v354
        %v632 = vpop.f32.mrf.mxu0
        %v633 = vadd.f32 %v424, %v632
        %v634 = vpop.f32.mrf.mxu0
        %v635 = vadd.f32 %v424, %v634
        %636 = vdwg.mxu0
        %637 = vmatpush.bf16.msra.mxu0 %v569
        %638 = vmatpush.bf16.msra.mxu0 %v568
        %639 = vmatpush.bf16.msra.mxu0 %v567
        %640 = vmatpush.bf16.msra.mxu0 %v566
        %641 = vmatpush.bf16.msra.mxu0 %v565
        %642 = vmatpush.bf16.msra.mxu0 %v564
        %643 = vmatpush.bf16.msra.mxu0 %v563
        %644 = vmatpush.bf16.msra.mxu0 %v562
        %645 = vmatmul.bf16.gmra.mxu0 %v351
        %v646 = vpop.f32.mrf.mxu0
        %v647 = vadd.f32 %v628, %v646
        %v648 = vpop.f32.mrf.mxu0
        %v649 = vadd.f32 %v630, %v648
        %650 = vmatmul.bf16.gmra.mxu0 %v355
        %v651 = vpop.f32.mrf.mxu0
        %v652 = vadd.f32 %v633, %v651
        %v653 = vpop.f32.mrf.mxu0
        %v654 = vadd.f32 %v635, %v653
        %655 = vdwg.mxu0
        %656 = vmatpush.bf16.msra.mxu0 %v577
        %657 = vmatpush.bf16.msra.mxu0 %v576
        %658 = vmatpush.bf16.msra.mxu0 %v575
        %659 = vmatpush.bf16.msra.mxu0 %v574
        %660 = vmatpush.bf16.msra.mxu0 %v573
        %661 = vmatpush.bf16.msra.mxu0 %v572
        %662 = vmatpush.bf16.msra.mxu0 %v571
        %663 = vmatpush.bf16.msra.mxu0 %v570
        %664 = vmatmul.bf16.gmra.mxu0 %v352
        %v665 = vpop.f32.mrf.mxu0
        %v666 = vadd.f32 %v647, %v665
        %v667 = vpop.f32.mrf.mxu0
        %v668 = vadd.f32 %v649, %v667
        %669 = vmatmul.bf16.gmra.mxu0 %v356
        %v670 = vpop.f32.mrf.mxu0
        %v671 = vadd.f32 %v652, %v670
        %v672 = vpop.f32.mrf.mxu0
        %v673 = vadd.f32 %v654, %v672
        %674 = vdwg.mxu0
        %675 = vmatpush.bf16.msra.mxu0 %v585
        %676 = vmatpush.bf16.msra.mxu0 %v584
        %677 = vmatpush.bf16.msra.mxu0 %v583
        %678 = vmatpush.bf16.msra.mxu0 %v582
        %679 = vmatpush.bf16.msra.mxu0 %v581
        %680 = vmatpush.bf16.msra.mxu0 %v580
        %681 = vmatpush.bf16.msra.mxu0 %v579
        %682 = vmatpush.bf16.msra.mxu0 %v578
        %683 = vmatmul.bf16.gmra.mxu0 %v353
        %v684 = vpop.f32.mrf.mxu0
        %v685 = vadd.f32 %v666, %v684
        %v686 = vpop.f32.mrf.mxu0
        %v687 = vadd.f32 %v668, %v686
        %688 = vmatmul.bf16.gmra.mxu0 %v357
        %v689 = vpop.f32.mrf.mxu0
        %v690 = vadd.f32 %v671, %v689
        %v691 = vpop.f32.mrf.mxu0
        %v692 = vadd.f32 %v673, %v691
        %693 = vdwg.mxu0
        %vm694 = vcmp.gt.f32.partialorder %v685, 0.0
        %vm695 = vcmp.gt.f32.partialorder %v687, 0.0
        %vm696 = vcmp.gt.f32.partialorder %v690, 0.0
        %vm697 = vcmp.gt.f32.partialorder %v692, 0.0
        %v698 = vmul.f32 %v685, 1.442695
        %v699 = vpow.pop %v698
        %v700 = vmul.f32 %v687, 1.442695
        %v701 = vpow.pop %v700
        %v702 = vmul.f32 %v690, 1.442695
        %v703 = vpow.pop %v702
        %v704 = vmul.f32 %v692, 1.442695
        %v705 = vpow.pop %v704
        %v706 = vsub.f32 %v699, 1.0
        %v707 = vsub.f32 %v701, 1.0
        %v708 = vsub.f32 %v703, 1.0
        %v709 = vsub.f32 %v705, 1.0
        %v710 = vsel %vm694, %v685, %v706
        %v711 = vsel %vm695, %v687, %v707
        %v712 = vsel %vm696, %v690, %v708
        %v713 = vsel %vm697, %v692, %v709
        %v714 = vld [vmem:[%s3] sm:$0xff]
        %v715 = vld [vmem:[%s3 + $0x8] sm:$0xff]
        %v716 = vld [vmem:[%s3 + $0x10] sm:$0xff]
        %v717 = vld [vmem:[%s3 + $0x18] sm:$0xff]
        %v718 = vld [vmem:[%s3 + $0x20] sm:$0xff]
        %v719 = vld [vmem:[%s3 + $0x28] sm:$0xff]
        %v720 = vld [vmem:[%s3 + $0x30] sm:$0xff]
        %v721 = vld [vmem:[%s3 + $0x38] sm:$0xff]
        %v722 = vld [vmem:[%s3 + $0x40] sm:$0xff]
        %v723 = vld [vmem:[%s3 + $0x48] sm:$0xff]
        %v724 = vld [vmem:[%s3 + $0x50] sm:$0xff]
        %v725 = vld [vmem:[%s3 + $0x58] sm:$0xff]
        %v726 = vld [vmem:[%s3 + $0x60] sm:$0xff]
        %v727 = vld [vmem:[%s3 + $0x68] sm:$0xff]
        %v728 = vld [vmem:[%s3 + $0x70] sm:$0xff]
        %v729 = vld [vmem:[%s3 + $0x78] sm:$0xff]
        %v730 = vld [vmem:[%s4] sm:$0x1]
        %v732 = vperm.slane %v730, 0
        %734 = vmatpush.msra.mxu0 %v729
        %735 = vmatpush.msra.mxu0 %v728
        %736 = vmatpush.msra.mxu0 %v727
        %737 = vmatpush.msra.mxu0 %v726
        %738 = vmatpush.msra.mxu0 %v725
        %739 = vmatpush.msra.mxu0 %v724
        %740 = vmatpush.msra.mxu0 %v723
        %741 = vmatpush.msra.mxu0 %v722
        %742 = vmatpush.msra.mxu0 %v721
        %743 = vmatpush.msra.mxu0 %v720
        %744 = vmatpush.msra.mxu0 %v719
        %745 = vmatpush.msra.mxu0 %v718
        %746 = vmatpush.msra.mxu0 %v717
        %747 = vmatpush.msra.mxu0 %v716
        %748 = vmatpush.msra.mxu0 %v715
        %749 = vmatpush.msra.mxu0 %v714
        %750 = vmatmul.f32.gmra.mxu0 %v710
        %v751 = vpop.f32.mrf.mxu0
        %v752 = vadd.f32 %v732, %v751
        %753 = vmatmul.f32.gmra.mxu0 %v711
        %v754 = vpop.f32.mrf.mxu0
        %v755 = vadd.f32 %v732, %v754
        %756 = vmatmul.f32.gmra.mxu0 %v712
        %v757 = vpop.f32.mrf.mxu0
        %v758 = vadd.f32 %v732, %v757
        %759 = vmatmul.f32.gmra.mxu0 %v713
        %v760 = vpop.f32.mrf.mxu0
        %v761 = vadd.f32 %v732, %v760
        %762 = vdwg.mxu0
        %v763 = vld [vmem:[%s323] sm:$0x1]
        %v765 = vperm.slane %v763, 0
        %v767 = vadd.f32 %v752, %v765
        %v768 = vadd.f32 %v755, %v765
        %v769 = vadd.f32 %v758, %v765
        %v770 = vadd.f32 %v761, %v765
        %vm771 = vcmask 244736
        %772 = vst.msk [vmem:[%s332] sm:$0xff] %vm771, %v767
        %773 = vst.msk [vmem:[%s332 + $0x8] sm:$0xff] %vm771, %v768
        %774 = vst.msk [vmem:[%s332 + $0x10] sm:$0xff] %vm771, %v769
        %775 = vst.msk [vmem:[%s332 + $0x18] sm:$0xff] %vm771, %v770
        %s776 = smul.u32 4, %s26
        %p777 = scmp.lt.s32.totalorder %s25, 1
        %s778 = scalar_select %p777, %s25, 1
        %p779 = scmp.lt.s32.totalorder %s776, 3
        %s780 = scalar_select %p779, %s776, 3
        %s781 = smul.addr %s778, 4
        %s782 = sadd.s32 %s780, %s781
        %s783 = smul.addr %s782, 8
        %s784 = scalar_lea.vmem %s6, %s783
        // Predicated region
        $region53: #{tpu_custom_call.1} parent=43 // pred_check
          %p785 = pneg %p191
        $region54: #{tpu_custom_call.1} parent=43 // pred_check_branch
          %787 = sbr.rel (%p785) target = $region56
        $region55: #{tpu_custom_call.1} parent=43 // pred_region
          %s788 = smul.u32 4, %s26
        $region56: #{tpu_custom_call.1} parent=43 // pred_fallthru
          _
      $region44: #{tpu_custom_call.1} parent=5 // pred_fallthru
        _
      %p789 = scmp.le.s32.totalorder 2, %s16
      // Predicated region
      $region57: #{tpu_custom_call.1} parent=5 // pred_check
        %p790 = pneg %p789
      $region58: #{tpu_custom_call.1} parent=5 // pred_check_branch
        %792 = sbr.rel (%p790) target = $region60
      $region59: #{tpu_custom_call.1} parent=5 // pred_region
        %s793 = ssub.s32 %s16, 2
        // Predicated region
        $region61: #{tpu_custom_call.1} parent=59 // pred_check
          %p794 = pneg %p197
        $region62: #{tpu_custom_call.1} parent=59 // pred_check_branch
          %796 = sbr.rel (%p794) target = $region64
        $region63: #{tpu_custom_call.1} parent=59 // pred_region
          %s797 = smul.u32 4, %s28
          %p798 = scmp.lt.s32.totalorder %s27, 1
          %s799 = scalar_select %p798, %s27, 1
          %p800 = scmp.lt.s32.totalorder %s797, 3
          %s801 = scalar_select %p800, %s797, 3
          %s802 = smul.addr %s799, 4
          %s803 = sadd.s32 %s801, %s802
          %s804 = smul.addr %s803, 8
          %s805 = scalar_lea.vmem %s6, %s804
        $region64: #{tpu_custom_call.1} parent=59 // pred_fallthru
          _
      $region60: #{tpu_custom_call.1} parent=5 // pred_fallthru
        _
    $region6: #{tpu_custom_call.1} parent=1 // loop_footer
      %s20 = sadd.s32 1, %s16
    $region7: #{tpu_custom_call.1} parent=1 // loop_footer_branch
      %15 = sbr.rel target = $region3
    $region8: #{tpu_custom_call.1} parent=1 // loop_exit
      _
    %806 = vsyncpa [#allocation3], 1
    %s807 = scalar_lea.sflag [#allocation3], 1
    %808 = vsyncpa %s807, 1
    %809 = vsyncpa [#allocation5], 1

</llo_original>
